<compile_context>
chip_gen: v7x
topology: tpu7x:2x2x1
jax: 0.10.0
libtpu: 0.0.40
codegen_flags: <defaults>
</compile_context>

<pallas_src>
import jax
import jax.numpy as jnp
import numpy as np
from jax.experimental import pallas as pl
from jax.experimental.pallas import tpu as pltpu


# ---------------------------------------------------------------------------
# Default Mamdani ruleset (copied verbatim from the PyTorch module __init__)
# ---------------------------------------------------------------------------
_VARIABLE_RULE_INDEX = [
    (0, 1), (0, 1), (0, 1), (0, 1), (0, 1), (0, 1), (0, 1), (0, 1), (0, 1), (0, 1),
    (0, 2), (0, 2), (0, 2), (0, 2), (0, 2), (0, 2), (0, 2), (0, 2), (0, 2), (0, 2),
    (0, 2), (0, 2), (0, 2), (0, 2), (0, 2),
]
_MEMBERSHIP_INDICES = [
    (1, 0), (1, 1), (1, 2), (1, 3), (1, 4), (3, 4), (3, 3), (3, 2), (3, 1), (3, 0),
    (1, 0), (1, 1), (1, 2), (1, 3), (1, 4), (2, 0), (2, 1), (2, 2), (2, 3), (2, 4),
    (3, 0), (3, 1), (3, 2), (3, 3), (3, 4),
]
N_RULES = len(_VARIABLE_RULE_INDEX)          # 25
_LANE = 128                                  # vreg lane width


def _round_up(n, m):
    return -(-n // m) * m


# ---------------------------------------------------------------------------
# Pallas kernel: fused one-hot-matmul gather + vreg-aligned elementwise min
# ---------------------------------------------------------------------------
def _antecedent_kernel(s_ref, x_ref, o_ref):
    # s_ref: (feat, 2*_LANE) fused one-hot selector; antecedent-0 rules in lanes 0..24,
    #                        antecedent-1 rules in lanes 128..152, zeros elsewhere.
    # x_ref: (tb, feat)      membership values for this case tile (cases-major).
    # o_ref: (tb, n_rules)   fire strengths.
    res = jnp.dot(x_ref[...], s_ref[...], preferred_element_type=jnp.float32)  # (tb, 256)
    # Split on the 128-lane vreg boundary -> the min is a pure VPU op (no lane shifts).
    w = jnp.minimum(res[:, :_LANE], res[:, _LANE:])                            # (tb, 128)
    o_ref[...] = w[:, :N_RULES].astype(o_ref.dtype)


def mamdani_antecedent_forward(x, block_cases=8192):
    """x: (n_cases, n_in, n_mfs) -> (n_cases, n_rules) fire strengths."""
    n_cases, n_in, n_mfs = x.shape
    feat = n_in * n_mfs
    dtype = x.dtype
    itemsize = jnp.dtype(dtype).itemsize

    # ---- fused one-hot selector (host constant, exact gather via matmul) ----
    var_idx = np.asarray(_VARIABLE_RULE_INDEX, dtype=np.int32)    # (n_rules, 2)
    mf_idx = np.asarray(_MEMBERSHIP_INDICES, dtype=np.int32)      # (n_rules, 2)
    flat_idx = var_idx * n_mfs + mf_idx                           # (n_rules, 2)

    s = np.zeros((feat, 2 * _LANE), dtype=np.float32)
    cols = np.arange(N_RULES)
    s[flat_idx[:, 0], cols] = 1.0                                 # antecedent-0 block
    s[flat_idx[:, 1], _LANE + cols] = 1.0                         # antecedent-1 block
    s_fused = jnp.asarray(s, dtype=dtype)                         # native dtype: no in-kernel casts

    # ---- cases-major: contiguous reshape only (no transpose / pad / slice copies) ----
    x2 = x.reshape(n_cases, feat)

    # ---- tile the case axis; ragged tail handled by Pallas block masking ----
    # Clamp tb so double-buffered lane-padded tiles stay well under physical VMEM
    # on every generation (v7x has 64 MiB physical).
    tb = min(_round_up(block_cases, 8), _round_up(n_cases, 8), 16384)
    if tb > n_cases:
        tb = n_cases                     # single block equal to the full case axis
    grid = (pl.cdiv(n_cases, tb),)

    out = pl.pallas_call(
        _antecedent_kernel,
        out_shape=jax.ShapeDtypeStruct((n_cases, N_RULES), dtype),
        grid=grid,
        in_specs=[
            # selector: constant block index -> DMA'd once, stays resident in VMEM
            pl.BlockSpec((feat, 2 * _LANE), lambda i: (0, 0)),
            # membership values: one cases-major tile per grid step
            pl.BlockSpec((tb, feat), lambda i: (i, 0)),
        ],
        out_specs=pl.BlockSpec((tb, N_RULES), lambda i: (i, 0)),
        compiler_params=pltpu.CompilerParams(
            dimension_semantics=("parallel",),        # shards case tiles across TCs on v7x
            vmem_limit_bytes=48 << 20),               # above v5e's 16 MiB scoped default
        cost_estimate=pl.CostEstimate(
            flops=2 * n_cases * feat * (2 * _LANE),
            transcendentals=0,
            bytes_accessed=(n_cases * feat + n_cases * N_RULES
                            + feat * 2 * _LANE) * itemsize),
    )(s_fused, x2)

    return out


# ---------------------------------------------------------------------------
# Pure-JAX reference (mirrors the PyTorch advanced indexing + min)
# ---------------------------------------------------------------------------
def _reference_forward(x):
    var_idx = jnp.asarray(_VARIABLE_RULE_INDEX, dtype=jnp.int32)
    mf_idx = jnp.asarray(_MEMBERSHIP_INDICES, dtype=jnp.int32)
    weights = x[:, var_idx, mf_idx]          # (n_cases, n_rules, 2)
    return jnp.min(weights, axis=2)          # (n_cases, n_rules)


if __name__ == "__main__":
    # Small shapes consistent with the default ruleset:
    #   variable indices in {0,1,2}  -> n_in  >= 3
    #   membership indices in {0..4} -> n_mfs >= 5
    key = jax.random.PRNGKey(0)

    # Case 1: tiny batch (single tile, block equal to the full case axis).
    n_cases, n_in, n_mfs = 8, 3, 5
    x = jax.random.uniform(key, (n_cases, n_in, n_mfs), dtype=jnp.float32)
    y = mamdani_antecedent_forward(x)
    jax.block_until_ready(y)
    y_ref = _reference_forward(x)
    np.testing.assert_allclose(np.asarray(y), np.asarray(y_ref), rtol=1e-6, atol=1e-6)
    assert y.shape == (n_cases, N_RULES) and y.dtype == x.dtype

    # Case 2: ragged batch exercising multiple grid tiles + masked tail block.
    n_cases2 = 300
    x2 = jax.random.uniform(jax.random.PRNGKey(1), (n_cases2, n_in, n_mfs),
                            dtype=jnp.float32)
    y2 = mamdani_antecedent_forward(x2, block_cases=128)
    jax.block_until_ready(y2)
    np.testing.assert_allclose(np.asarray(y2), np.asarray(_reference_forward(x2)),
                               rtol=1e-6, atol=1e-6)
    assert y2.shape == (n_cases2, N_RULES)

    print("KERNEL_OK")
</pallas_src>

<mosaic_0001>
module attributes {stable_mosaic.version = 11 : i64} {
  func.func @_antecedent_kernel(%arg0: i32, %arg1: memref<15x256xf32, #tpu.memory_space<vmem>>, %arg2: memref<8x15xf32, #tpu.memory_space<vmem>>, %arg3: memref<8x25xf32, #tpu.memory_space<vmem>>) attributes {dimension_semantics = [#tpu.dimension_semantics<parallel>], iteration_bounds = array<i64: 1>, scalar_prefetch = 0 : i64, scratch_operands = 0 : i64, tpu.core_type = #tpu.core_type<tc>, window_params = [{pipeline_mode = #tpu.pipeline_mode<synchronous>, transform_indices = @transform_0, window_bounds = array<i64: 15, 256>}, {transform_indices = @transform_1, window_bounds = array<i64: 8, 15>}, {transform_indices = @transform_2, window_bounds = array<i64: 8, 25>}]} {
    %c0 = arith.constant 0 : index
    %c0_0 = arith.constant 0 : index
    %0 = vector.load %arg2[%c0, %c0_0] : memref<8x15xf32, #tpu.memory_space<vmem>>, vector<8x15xf32>
    %c0_1 = arith.constant 0 : index
    %c0_2 = arith.constant 0 : index
    %1 = vector.load %arg1[%c0_1, %c0_2] : memref<15x256xf32, #tpu.memory_space<vmem>>, vector<15x256xf32>
    %cst = arith.constant dense<0.000000e+00> : vector<8x256xf32>
    %2 = tpu.matmul %0, %1, %cst {dimension_numbers = #tpu.dot_dimension_numbers<[1], [0], [0], [1], [0, 0, 1, 1], [], []>} : vector<8x15xf32>, vector<15x256xf32>, vector<8x256xf32> -> vector<8x256xf32>
    %3 = vector.extract_strided_slice %2 {offsets = [0, 0], sizes = [8, 128], strides = [1, 1]} : vector<8x256xf32> to vector<8x128xf32>
    %4 = vector.extract_strided_slice %2 {offsets = [0, 128], sizes = [8, 128], strides = [1, 1]} : vector<8x256xf32> to vector<8x128xf32>
    %5 = arith.minimumf %3, %4 : vector<8x128xf32>
    %6 = vector.extract_strided_slice %5 {offsets = [0, 0], sizes = [8, 25], strides = [1, 1]} : vector<8x128xf32> to vector<8x25xf32>
    %c0_3 = arith.constant 0 : index
    %c0_4 = arith.constant 0 : index
    %7 = vector.load %arg3[%c0_3, %c0_4] : memref<8x25xf32, #tpu.memory_space<vmem>>, vector<8x25xf32>
    tpu.vector_store %arg3[%c0_3, %c0_4], %6 {strides = array<i32>} : memref<8x25xf32, #tpu.memory_space<vmem>>, vector<8x25xf32>,
    return
  }
  func.func @transform_0(%arg0: i32) -> (i32, i32) {
    %c0_i32 = arith.constant 0 : i32
    %c0_i32_0 = arith.constant 0 : i32
    %c0_i32_1 = arith.constant 0 : i32
    return %c0_i32, %c0_i32_0 : i32, i32
  }
  func.func @transform_1(%arg0: i32) -> (i32, i32) {
    %c0_i32 = arith.constant 0 : i32
    %c0_i32_0 = arith.constant 0 : i32
    return %arg0, %c0_i32 : i32, i32
  }
  func.func @transform_2(%arg0: i32) -> (i32, i32) {
    %c0_i32 = arith.constant 0 : i32
    %c0_i32_0 = arith.constant 0 : i32
    return %arg0, %c0_i32 : i32, i32
  }
}

</mosaic_0001>

<llo_original>
// kernel: tpu_custom_call.1
$region0: #{tpu_custom_call.1}
  #allocation0 [shape = 'u32[]', space=smem, size = 0x4, offset = 0x4, fixed_abs, tag = 'smem constant byte address 0x4 - core index']
  #allocation1 [shape = 'u32[144,128]{1,0:T(1,128)}', space=vmem, size = 0x12000, scoped, tag = 'internal scratch']
  %s0 = inlined_call_operand.hbm [shape: f32[15,256], index: 0, kind: input, shape index: {}]
  %s1 = inlined_call_operand.hbm [shape: f32[8,15], index: 1, kind: input, shape index: {}]
  %s2 = inlined_call_operand.hbm [shape: f32[8,25], index: 2, kind: output, shape index: {}]
  %s3 = sld [smem:[#allocation0]]
  $region26: #{tpu_custom_call.1} parent=0
    _
  %s5 = ssub.s32 1, %s3
  %s6 = scalar_select 0, %s5, %s3
  $region1: #{tpu_custom_call.1} parent=0
    #allocation2 [shape = 'u8[16384]{0}', space=vmem, size = 0x4000, scoped, tag = 'input window, operand 0, single buffered']
    #allocation3 [shape = 's32[1]{0}', space=sflag, size = 0x4, scoped, tag = 'scoped memory for tpu_custom_call.1']
    #allocation4 [shape = 's32[1]{0}', space=sflag, size = 0x4, scoped, tag = 'scoped memory for tpu_custom_call.1']
    #allocation5 [shape = 'u8[4096]{0}', space=vmem, size = 0x1000, scoped, tag = 'input window, operand 1, single buffered']
    #allocation6 [shape = 's32[1]{0}', space=sflag, size = 0x4, scoped, tag = 'scoped memory for tpu_custom_call.1']
    #allocation7 [shape = 'u8[4096]{0}', space=vmem, size = 0x1000, scoped, tag = 'output window, operand 0, single buffered']
    %7 = vsyncpa [#allocation3], 0
    %8 = vsyncpa [#allocation6], 0
    %9 = vsyncpa [#allocation4], 0
    // Predicated region
    $region2: #{tpu_custom_call.1} parent=1 // pred_check
      _
    $region3: #{tpu_custom_call.1} parent=1 // pred_check_branch
      %11 = sbr.rel (0) target = $region5
    $region4: #{tpu_custom_call.1} parent=1 // pred_region
      %s13 = ssub.s32 512, 512
      %14 = vsyncadd [#allocation3], %s13
      %s15 = sshll.u32 [#allocation2], 4
      %s16 = int_to_ptr.vmem [resolvable:$true] %s15
      %21 = dma.hbm_to_vmem [thread:$0]  %s0, 512, %s16, [#allocation3], 256, 256, 16
    $region5: #{tpu_custom_call.1} parent=1 // pred_fallthru
      _
    // Predicated region
    $region6: #{tpu_custom_call.1} parent=1 // pred_check
      _
    $region7: #{tpu_custom_call.1} parent=1 // pred_check_branch
      %23 = sbr.rel (0) target = $region9
    $region8: #{tpu_custom_call.1} parent=1 // pred_region
      %s25 = ssub.s32 128, 128
      %26 = vsyncadd [#allocation6], %s25
      %s28 = sshll.u32 [#allocation5], 4
      %s29 = int_to_ptr.vmem [resolvable:$true] %s28
      %31 = dma.hbm_to_vmem [thread:$0]  %s1, 128, %s29, [#allocation6]
    $region9: #{tpu_custom_call.1} parent=1 // pred_fallthru
      _
    // Predicated region
    $region10: #{tpu_custom_call.1} parent=1 // pred_check
      _
    $region11: #{tpu_custom_call.1} parent=1 // pred_check_branch
      %33 = sbr.rel (0) target = $region13
    $region12: #{tpu_custom_call.1} parent=1 // pred_region
      %34 = dma.done [#allocation3], 512
    $region13: #{tpu_custom_call.1} parent=1 // pred_fallthru
      _
    // Predicated region
    $region14: #{tpu_custom_call.1} parent=1 // pred_check
      _
    $region15: #{tpu_custom_call.1} parent=1 // pred_check_branch
      %36 = sbr.rel (0) target = $region17
    $region16: #{tpu_custom_call.1} parent=1 // pred_region
      %37 = dma.done [#allocation6], 128
    $region17: #{tpu_custom_call.1} parent=1 // pred_fallthru
      _
    %v38 = vld [vmem:[#allocation5] sm:$0xff]
    %v39 = vld [vmem:[#allocation2] sm:$0xff]
    %v40 = vld [vmem:[#allocation2 + $0x8] sm:$0xff]
    %v41 = vld [vmem:[#allocation2 + $0x10] sm:$0x7f]
    %v42 = vld [vmem:[#allocation2 + $0x18] sm:$0x7f]
    %vm43 = vcmask 121856
    %v45 = vsel %vm43, %v38, 0
    %vm47 = vcmask 1046528
    %v49 = vsel %vm47, %v41, 0
    %v52 = vsel %vm47, %v42, 0
    %54 = vmatprep.subr.mxu0 %v40
    %55 = vmatpush1.msra.mxu0 %v39
    %56 = vmatprep.subr.mxu0 %v52
    %57 = vmatpush1.msra.mxu0 %v49
    %58 = vmatprep.subr.mxu0 0.0
    %59 = vmatpush1.msra.mxu0 0.0
    %60 = vmatprep.subr.mxu0 0.0
    %61 = vmatpush1.msra.mxu0 0.0
    %62 = vmatprep.subr.mxu0 0.0
    %63 = vmatpush1.msra.mxu0 0.0
    %64 = vmatprep.subr.mxu0 0.0
    %65 = vmatpush1.msra.mxu0 0.0
    %66 = vmatprep.subr.mxu0 0.0
    %67 = vmatpush1.msra.mxu0 0.0
    %68 = vmatprep.subr.mxu0 0.0
    %69 = vmatpush1.msra.mxu0 0.0
    %70 = vmatprep.subr.mxu0 0.0
    %71 = vmatpush1.msra.mxu0 0.0
    %72 = vmatprep.subr.mxu0 0.0
    %73 = vmatpush1.msra.mxu0 0.0
    %74 = vmatprep.subr.mxu0 0.0
    %75 = vmatpush1.msra.mxu0 0.0
    %76 = vmatprep.subr.mxu0 0.0
    %77 = vmatpush1.msra.mxu0 0.0
    %78 = vmatprep.subr.mxu0 0.0
    %79 = vmatpush1.msra.mxu0 0.0
    %80 = vmatprep.subr.mxu0 0.0
    %81 = vmatpush1.msra.mxu0 0.0
    %82 = vmatprep.subr.mxu0 0.0
    %83 = vmatpush1.msra.mxu0 0.0
    %84 = vmatprep.subr.mxu0 0.0
    %85 = vmatpush1.msra.mxu0 0.0
    %86 = vmatprep.subr.mxu0 0.0
    %87 = vmatpush1.msra.mxu0 0.0
    %88 = vmatprep.subr.mxu0 0.0
    %89 = vmatpush1.msra.mxu0 0.0
    %90 = vmatprep.subr.mxu0 0.0
    %91 = vmatpush1.msra.mxu0 0.0
    %92 = vmatprep.subr.mxu0 0.0
    %93 = vmatpush1.msra.mxu0 0.0
    %94 = vmatprep.subr.mxu0 0.0
    %95 = vmatpush1.msra.mxu0 0.0
    %96 = vmatprep.subr.mxu0 0.0
    %97 = vmatpush1.msra.mxu0 0.0
    %98 = vmatprep.subr.mxu0 0.0
    %99 = vmatpush1.msra.mxu0 0.0
    %100 = vmatprep.subr.mxu0 0.0
    %101 = vmatpush1.msra.mxu0 0.0
    %102 = vmatprep.subr.mxu0 0.0
    %103 = vmatpush1.msra.mxu0 0.0
    %104 = vmatprep.subr.mxu0 0.0
    %105 = vmatpush1.msra.mxu0 0.0
    %106 = vmatprep.subr.mxu0 0.0
    %107 = vmatpush1.msra.mxu0 0.0
    %108 = vmatprep.subr.mxu0 0.0
    %109 = vmatpush1.msra.mxu0 0.0
    %110 = vmatprep.subr.mxu0 0.0
    %111 = vmatpush1.msra.mxu0 0.0
    %112 = vmatprep.subr.mxu0 0.0
    %113 = vmatpush1.msra.mxu0 0.0
    %114 = vmatprep.subr.mxu0 0.0
    %115 = vmatpush1.msra.mxu0 0.0
    %116 = vmatprep.subr.mxu0 0.0
    %117 = vmatpush1.msra.mxu0 0.0
    %118 = vmatprep.mubr.f32.mxu0 0.0
    %119 = vmatmul.mubr.f32.gmra.mrb[0].mxu0 %v45
    %v120 = vpop.f32.mrb[0].mxu0
    %v121 = vadd.f32 0.0, %v120
    %v122 = vpop.f32.mrb[0].mxu0
    %v123 = vadd.f32 0.0, %v122
    %124 = vdwg.mxu0
    %v125 = vmin.f32 %v121, %v123
    %vm126 = vcmask 203776
    %127 = vst.msk [vmem:[#allocation7] sm:$0xff] %vm126, %v125
    // Predicated region
    $region18: #{tpu_custom_call.1} parent=1 // pred_check
      _
    $region19: #{tpu_custom_call.1} parent=1 // pred_check_branch
      %129 = sbr.rel (0) target = $region21
    $region20: #{tpu_custom_call.1} parent=1 // pred_region
      %s131 = ssub.s32 128, 128
      %132 = vsyncadd [#allocation4], %s131
      %s134 = sshll.u32 [#allocation7], 4
      %s135 = int_to_ptr.vmem [resolvable:$true] %s134
      %137 = dma.vmem_to_hbm [thread:$0]  %s135, 128, %s2, [#allocation4]
    $region21: #{tpu_custom_call.1} parent=1 // pred_fallthru
      _
    // Predicated region
    $region22: #{tpu_custom_call.1} parent=1 // pred_check
      _
    $region23: #{tpu_custom_call.1} parent=1 // pred_check_branch
      %139 = sbr.rel (0) target = $region25
    $region24: #{tpu_custom_call.1} parent=1 // pred_region
      %140 = dma.done [#allocation4], 128
    $region25: #{tpu_custom_call.1} parent=1 // pred_fallthru
      _
    %141 = vsyncpa [#allocation3], 1
    %142 = vsyncpa [#allocation6], 1
    %143 = vsyncpa [#allocation4], 1

</llo_original>
